<compile_context>
chip_gen: v5e
topology: v5e:2x2
jax: 0.10.0
libtpu: 0.0.40
codegen_flags: <defaults>
</compile_context>

<pallas_src>
import functools

import jax
import jax.numpy as jnp
from jax.experimental import pallas as pl
from jax.experimental.pallas import tpu as pltpu

_EPS = 1e-6
_LANE = 128
_WIDTHS = (8192, 4096, 2048, 1024, 512, 256, 128)


def _square_safe_log_kernel(x_ref, o_ref):
    # Elementwise: y = log(max(x*x, eps)).  Compute in f32, cast on store.
    x = x_ref[...].astype(jnp.float32)
    o_ref[...] = jnp.log(jnp.maximum(x * x, _EPS)).astype(o_ref.dtype)


def _sublanes(dtype):
    # packed sublane rows per vreg: f32 -> 8, bf16/f16 -> 16, int8/fp8 -> 32
    return {4: 8, 2: 16, 1: 32}.get(jnp.dtype(dtype).itemsize, 8)


def _out_dtype(dtype):
    # log output spans ~[-13.8, +inf): keep >=16-bit float dtypes, promote
    # everything else (int8 / fp8 / integers) to float32.
    d = jnp.dtype(dtype)
    if jnp.issubdtype(d, jnp.floating) and d.itemsize >= 2:
        return d
    return jnp.dtype(jnp.float32)


@functools.lru_cache(maxsize=None)
def _hw_params():
    """(target_block_bytes_f32_equiv, vmem_limit_bytes), generation-aware."""
    vmem_cap = None
    try:
        vmem_cap = int(pltpu.get_tpu_info().vmem_capacity_bytes)
    except Exception:
        try:
            kind = jax.devices()[0].device_kind.lower()
            vmem_cap = (64 << 20) if "v7" in kind else (128 << 20)
        except Exception:
            vmem_cap = 128 << 20
    if vmem_cap <= (80 << 20):
        # v7x-class: 3.2 TB/s HBM makes the ~0.35us grid-step overhead relatively
        # expensive -> bigger blocks; but only 64 MiB physical VMEM -> cap limit.
        return 6 << 20, 48 << 20
    # v5e / v6e: 128 MiB physical VMEM, slower HBM -> 4 MiB blocks suffice.
    return 4 << 20, 64 << 20


def _choose_cols(n, sublane):
    """Widest lane-dense column count that exactly divides n, or None."""
    # Prefer a factorization whose row count is a sublane multiple.
    for c in _WIDTHS:
        if n % c == 0 and (n // c) % sublane == 0:
            return c
    # Any exact lane-dense factorization (ragged rows are still legal: the block
    # then either spans the full row extent or is a sublane multiple).
    for c in _WIDTHS:
        if n % c == 0:
            return c
    return None


def _choose_tile_rows(rows, cols, sublane, target_block_bytes):
    if rows <= sublane:
        return rows  # single block spanning the full row extent (always legal)
    # Size blocks by f32-equivalent bytes: the kernel upcasts to f32, so the
    # live working set is ~4 B/elem regardless of the I/O dtype.
    t = max(sublane, (target_block_bytes // (cols * 4)) // sublane * sublane)
    if rows >= 2 * sublane:
        # Cap so the 1-D grid has >=2 steps: with dimension_semantics=
        # ("parallel",) v7x megacore then shards the row axis across its 2 TCs.
        half = pl.cdiv(pl.cdiv(rows, 2), sublane) * sublane
        t = min(t, half)
    return rows if t >= rows else t


def _expression_2d(x2d, out_dtype):
    """Apply the expression to a lane-dense 2-D array via Pallas."""
    rows, cols = x2d.shape
    target_block_bytes, vmem_limit = _hw_params()
    sublane = _sublanes(x2d.dtype)
    tile_rows = _choose_tile_rows(rows, cols, sublane, target_block_bytes)
    grid = (pl.cdiv(rows, tile_rows),)
    n = rows * cols
    in_bytes = jnp.dtype(x2d.dtype).itemsize
    out_bytes = jnp.dtype(out_dtype).itemsize
    return pl.pallas_call(
        _square_safe_log_kernel,
        out_shape=jax.ShapeDtypeStruct((rows, cols), out_dtype),
        grid_spec=pltpu.PrefetchScalarGridSpec(
            num_scalar_prefetch=0,
            grid=grid,
            in_specs=[pl.BlockSpec((tile_rows, cols), lambda i: (i, 0))],
            out_specs=pl.BlockSpec((tile_rows, cols), lambda i: (i, 0)),
        ),
        compiler_params=pltpu.CompilerParams(
            dimension_semantics=("parallel",),
            vmem_limit_bytes=vmem_limit),
        cost_estimate=pl.CostEstimate(
            flops=2 * n, transcendentals=n,
            bytes_accessed=n * (in_bytes + out_bytes)),
    )(x2d)


@jax.jit
def square_safe_log(x):
    """y = log(max(x*x, eps)) elementwise, Pallas-backed, any input shape."""
    orig_shape = x.shape
    n = x.size
    out_dtype = _out_dtype(x.dtype)
    sublane = _sublanes(x.dtype)

    cols = _choose_cols(n, sublane)
    if cols is not None:
        # Pad-free fast path: contiguous reshape, wide unmasked stores.
        y2d = _expression_2d(x.reshape(n // cols, cols), out_dtype)
        return y2d.reshape(orig_shape)

    # Ragged tail (n not a multiple of 128): pad only to the next 128 boundary.
    # TODO(synk): replace with an in-place masked final block to drop the
    # full-tensor pad + slice traffic.
    n_pad = pl.cdiv(n, _LANE) * _LANE
    cols = _choose_cols(n_pad, sublane)  # always succeeds (n_pad % 128 == 0)
    flat = jnp.pad(x.reshape(-1), (0, n_pad - n))
    y2d = _expression_2d(flat.reshape(n_pad // cols, cols), out_dtype)
    return y2d.reshape(-1)[:n].reshape(orig_shape)


class Expression:
    """JAX/Pallas analogue of the PyTorch Expression module.

    expression_fn is any callable applied on the forward pass; the default is
    the Pallas-backed square -> safe_log expression.
    """

    def __init__(self, expression_fn=None):
        self.expression_fn = (expression_fn if expression_fn is not None
                              else square_safe_log)

    def __call__(self, *x):
        return self.expression_fn(*x)

    def __repr__(self):
        if hasattr(self.expression_fn, 'func') and hasattr(self.expression_fn, 'kwargs'):
            expression_str = '{:s} {:s}'.format(
                self.expression_fn.func.__name__, str(self.expression_fn.kwargs))
        elif hasattr(self.expression_fn, '__name__'):
            expression_str = self.expression_fn.__name__
        else:
            expression_str = repr(self.expression_fn)
        return self.__class__.__name__ + '(expression=%s) ' % expression_str


if __name__ == "__main__":
    key = jax.random.PRNGKey(0)
    # small NCHW input consistent with typical conv-style usage
    x = jax.random.normal(key, (2, 4, 16, 16), dtype=jnp.float32)

    module = Expression()
    y = jax.block_until_ready(module(x))

    # reference check in plain JAX
    y_ref = jnp.log(jnp.maximum(x * x, _EPS))
    assert y.shape == x.shape and y.dtype == x.dtype
    assert jnp.allclose(y, y_ref, atol=1e-5, rtol=1e-5)

    # also exercise the ragged-tail path (n = 75, not a multiple of 128)
    x2 = jax.random.normal(jax.random.PRNGKey(1), (3, 5, 5), dtype=jnp.float32)
    y2 = jax.block_until_ready(module(x2))
    assert y2.shape == x2.shape
    assert jnp.allclose(y2, jnp.log(jnp.maximum(x2 * x2, _EPS)), atol=1e-5, rtol=1e-5)

    print("KERNEL_OK")
</pallas_src>

<mosaic_0001>
module attributes {stable_mosaic.version = 11 : i64} {
  func.func @_square_safe_log_kernel(%arg0: i32, %arg1: memref<8x256xf32, #tpu.memory_space<vmem>>, %arg2: memref<8x256xf32, #tpu.memory_space<vmem>>) attributes {dimension_semantics = [#tpu.dimension_semantics<parallel>], iteration_bounds = array<i64: 1>, scalar_prefetch = 0 : i64, scratch_operands = 0 : i64, tpu.core_type = #tpu.core_type<tc>, window_params = [{transform_indices = @transform_0, window_bounds = array<i64: 8, 256>}, {transform_indices = @transform_1, window_bounds = array<i64: 8, 256>}]} {
    %c0 = arith.constant 0 : index
    %c0_0 = arith.constant 0 : index
    %0 = vector.load %arg1[%c0, %c0_0] : memref<8x256xf32, #tpu.memory_space<vmem>>, vector<8x256xf32>
    %1 = arith.mulf %0, %0 : vector<8x256xf32>
    %cst = arith.constant 9.99999997E-7 : f32
    %2 = vector.broadcast %cst : f32 to vector<8x256xf32>
    %3 = arith.maximumf %1, %2 : vector<8x256xf32>
    %4 = math.log %3 : vector<8x256xf32>
    %c0_1 = arith.constant 0 : index
    %c0_2 = arith.constant 0 : index
    %5 = vector.load %arg2[%c0_1, %c0_2] : memref<8x256xf32, #tpu.memory_space<vmem>>, vector<8x256xf32>
    tpu.vector_store %arg2[%c0_1, %c0_2], %4 {strides = array<i32>} : memref<8x256xf32, #tpu.memory_space<vmem>>, vector<8x256xf32>,
    return
  }
  func.func @transform_0(%arg0: i32) -> (i32, i32) {
    %c0_i32 = arith.constant 0 : i32
    %c0_i32_0 = arith.constant 0 : i32
    return %arg0, %c0_i32 : i32, i32
  }
  func.func @transform_1(%arg0: i32) -> (i32, i32) {
    %c0_i32 = arith.constant 0 : i32
    %c0_i32_0 = arith.constant 0 : i32
    return %arg0, %c0_i32 : i32, i32
  }
}

</mosaic_0001>

<llo_original>
// kernel: square_safe_log.1
$region0: #{square_safe_log.1}
  #allocation0 [shape = 'u32[]', space=smem, size = 0x4, offset = 0x4, fixed_abs, tag = 'smem constant byte address 0x4 - core index']
  #allocation1 [shape = 'u32[72,128]{1,0:T(1,128)}', space=vmem, size = 0x9000, scoped, tag = 'internal scratch']
  %s0 = inlined_call_operand.vmem [shape: f32[8,256], index: 0, kind: input, shape index: {}]
  %s1 = inlined_call_operand.vmem [shape: f32[8,256], index: 1, kind: output, shape index: {}]
  %s2 = sld [smem:[#allocation0]]
  $region14: #{square_safe_log.1} parent=0
    _
  %s4 = ssub.s32 1, %s2
  %s5 = scalar_select 0, %s4, %s2
  // Predicated region
  $region2: #{square_safe_log.1} parent=0 // pred_check
    _
  $region3: #{square_safe_log.1} parent=0 // pred_check_branch
    %7 = sbr.rel (0) target = $region5
  $region4: #{square_safe_log.1} parent=0 // pred_region
    _
  $region5: #{square_safe_log.1} parent=0 // pred_fallthru
    _
  %v8 = vld [vmem:[%s0] sm:$0xff]
  %v9 = vld [vmem:[%s0 + $0x8] sm:$0xff]
  %v10 = vmul.f32 %v8, %v8
  %v11 = vmul.f32 %v9, %v9
  %v12 = vmax.f32 %v10, 1e-06
  %v13 = vmax.f32 %v11, 1e-06
  %v14 = vlog2.pop %v12
  %v15 = vmul.f32 %v14, 0.6931472
  %v16 = vlog2.pop %v13
  %v17 = vmul.f32 %v16, 0.6931472
  %18 = vst [vmem:[%s1] sm:$0xff] %v15
  %19 = vst [vmem:[%s1 + $0x8] sm:$0xff] %v17
  // Predicated region
  $region6: #{square_safe_log.1} parent=0 // pred_check
    _
  $region7: #{square_safe_log.1} parent=0 // pred_check_branch
    %21 = sbr.rel (0) target = $region9
  $region8: #{square_safe_log.1} parent=0 // pred_region
    _
  $region9: #{square_safe_log.1} parent=0 // pred_fallthru
    _
  // Predicated region
  $region10: #{square_safe_log.1} parent=0 // pred_check
    _
  $region11: #{square_safe_log.1} parent=0 // pred_check_branch
    %23 = sbr.rel (0) target = $region13
  $region12: #{square_safe_log.1} parent=0 // pred_region
    _
  $region13: #{square_safe_log.1} parent=0 // pred_fallthru
    _

</llo_original>
